<compile_context>
chip_gen: v7x
topology: tpu7x:2x2x1
jax: 0.10.0
libtpu: 0.0.40
codegen_flags: <defaults>
</compile_context>

<pallas_src>
import functools

import jax
import jax.numpy as jnp
from jax.experimental import pallas as pl
from jax.experimental.pallas import tpu as pltpu

_LANES = 128
_INV_SQRT2 = 0.7071067811865476


def _device_info():
    """Per-TPU-generation tuning knobs (wrapper-side, trace-time only)."""
    try:
        kind = jax.devices()[0].device_kind.lower()
    except Exception:  # pragma: no cover - e.g. no devices visible
        kind = ""
    if "v7" in kind:
        # 2 TCs/chip, 64 MiB VMEM/TC, ~3.2 TB/s HBM: big blocks, declare VMEM.
        return {"block_bytes": 8 << 20, "cores": 2, "vmem_limit": 48 << 20,
                "exp_erf": True}
    if "v6" in kind:
        # 1 TC, 32 MiB default scoped VMEM, ~1.4 TB/s HBM.
        return {"block_bytes": 4 << 20, "cores": 1, "vmem_limit": None,
                "exp_erf": False}
    # v5e and anything unknown: conservative (16 MiB default scoped VMEM).
    return {"block_bytes": 2 << 20, "cores": 1, "vmem_limit": None,
            "exp_erf": False}


def _erf_exp(z):
    """Abramowitz & Stegun 7.1.26 erf (exp-based, EUP-friendly). |err|<~1.5e-7."""
    p = jnp.float32(0.3275911)
    a1 = jnp.float32(0.254829592)
    a2 = jnp.float32(-0.284496736)
    a3 = jnp.float32(1.421413741)
    a4 = jnp.float32(-1.453152027)
    a5 = jnp.float32(1.061405429)
    az = jnp.abs(z)
    t = 1.0 / (1.0 + p * az)
    poly = ((((a5 * t + a4) * t + a3) * t + a2) * t + a1) * t
    return jnp.sign(z) * (1.0 - poly * jnp.exp(-az * az))


def _gelu_kernel(x_ref, o_ref, *, use_exp_erf):
    xf = x_ref[...].astype(jnp.float32)
    z = xf * jnp.float32(_INV_SQRT2)
    erf = _erf_exp(z) if use_exp_erf else jax.lax.erf(z)
    # exact GeLU: 0.5 * x * (1 + erf(x / sqrt(2)))
    o_ref[...] = (0.5 * xf * (1.0 + erf)).astype(o_ref.dtype)


def _gelu_ref_jnp(x):
    """Plain-jnp exact GeLU (used only for <128-element tails / tiny inputs)."""
    xf = x.astype(jnp.float32)
    y = 0.5 * xf * (1.0 + jax.lax.erf(xf * jnp.float32(_INV_SQRT2)))
    return y.astype(x.dtype)


def gelu_pallas(x):
    """Exact GeLU via a Pallas streaming kernel. Floating dtypes only."""
    orig_shape = x.shape
    dtype = x.dtype
    assert jnp.issubdtype(dtype, jnp.floating), (
        "gelu_pallas supports floating dtypes only")
    n = x.size
    if n == 0:
        return x

    info = _device_info()
    itemsize = jnp.dtype(dtype).itemsize
    # dtype-aware sublane packing: f32 -> 8, bf16 -> 16
    sublane = max(8, 32 // itemsize)

    rem = n % _LANES
    n_main = n - rem
    rows = n_main // _LANES

    if rows == 0:
        # Tiny input (<128 elements): a kernel launch is pure overhead.
        return _gelu_ref_jnp(x)

    flat = x.reshape(-1)
    if rem == 0:
        # Contiguous row-major reshape: no data movement, no pad.
        x2d = flat.reshape(rows, _LANES)
    else:
        # Kernel runs on the 128-aligned prefix; the tail is handled below.
        x2d = jax.lax.slice(flat, (0,), (n_main,)).reshape(rows, _LANES)

    # ---- tile selection ------------------------------------------------
    bytes_per_row = _LANES * itemsize
    if rows <= sublane:
        # Full-extent block (exempt from the (8,128) divisibility rule).
        tr = rows
    else:
        tr = (info["block_bytes"] // bytes_per_row) // sublane * sublane
        tr = max(tr, sublane)
        tr = min(tr, pl.cdiv(rows, sublane) * sublane)
        if info["cores"] > 1:
            # 2-TC chips shard the "parallel" axis: keep >= 2*cores grid steps
            # (when the sublane granularity allows) so both cores get work.
            target_steps = 2 * info["cores"]
            while pl.cdiv(rows, tr) < target_steps and tr > sublane:
                tr = max(pl.cdiv(pl.cdiv(tr, 2), sublane) * sublane, sublane)

    grid = (pl.cdiv(rows, tr),)

    cost = pl.CostEstimate(
        flops=10 * n_main,
        transcendentals=n_main,
        bytes_accessed=2 * n_main * itemsize,
    )

    cp_kwargs = dict(dimension_semantics=("parallel",))
    if info["vmem_limit"] is not None:
        cp_kwargs["vmem_limit_bytes"] = info["vmem_limit"]

    kernel = functools.partial(_gelu_kernel, use_exp_erf=info["exp_erf"])

    out2d = pl.pallas_call(
        kernel,
        out_shape=jax.ShapeDtypeStruct((rows, _LANES), dtype),
        grid_spec=pltpu.PrefetchScalarGridSpec(
            num_scalar_prefetch=0,
            grid=grid,
            in_specs=[pl.BlockSpec((tr, _LANES), lambda i: (i, 0))],
            out_specs=pl.BlockSpec((tr, _LANES), lambda i: (i, 0)),
        ),
        compiler_params=pltpu.CompilerParams(**cp_kwargs),
        cost_estimate=cost,
    )(x2d)

    out_flat = out2d.reshape(-1)
    if rem != 0:
        tail = _gelu_ref_jnp(jax.lax.slice(flat, (n_main,), (n,)))
        out_flat = jnp.concatenate([out_flat, tail])
    return out_flat.reshape(orig_shape)


if __name__ == "__main__":
    key = jax.random.PRNGKey(0)
    # small NCHW input consistent with the (purely elementwise) module
    x = jax.random.normal(key, (2, 4, 16, 16), dtype=jnp.float32)

    y = gelu_pallas(x)
    y = jax.block_until_ready(y)

    # reference check against jax.nn.gelu (exact / erf variant)
    y_ref = jax.nn.gelu(x, approximate=False)
    assert y.shape == x.shape and y.dtype == x.dtype
    assert jnp.max(jnp.abs(y - y_ref)) < 1e-5

    print("KERNEL_OK")
</pallas_src>

<mosaic_0001>
module attributes {stable_mosaic.version = 11 : i64} {
  func.func @_gelu_kernel(%arg0: i32, %arg1: memref<16x128xf32, #tpu.memory_space<vmem>>, %arg2: memref<16x128xf32, #tpu.memory_space<vmem>>) attributes {dimension_semantics = [#tpu.dimension_semantics<parallel>], iteration_bounds = array<i64: 1>, scalar_prefetch = 0 : i64, scratch_operands = 0 : i64, tpu.core_type = #tpu.core_type<tc>, window_params = [{transform_indices = @transform_0, window_bounds = array<i64: 16, 128>}, {transform_indices = @transform_1, window_bounds = array<i64: 16, 128>}]} {
    %c0 = arith.constant 0 : index
    %c0_0 = arith.constant 0 : index
    %0 = vector.load %arg1[%c0, %c0_0] : memref<16x128xf32, #tpu.memory_space<vmem>>, vector<16x128xf32>
    %cst = arith.constant 0.707106769 : f32
    %1 = vector.broadcast %cst : f32 to vector<16x128xf32>
    %2 = arith.mulf %0, %1 : vector<16x128xf32>
    %3 = math.erf %2 : vector<16x128xf32>
    %cst_1 = arith.constant 5.000000e-01 : f32
    %4 = vector.broadcast %cst_1 : f32 to vector<16x128xf32>
    %5 = arith.mulf %4, %0 : vector<16x128xf32>
    %cst_2 = arith.constant 1.000000e+00 : f32
    %6 = vector.broadcast %cst_2 : f32 to vector<16x128xf32>
    %7 = arith.addf %6, %3 : vector<16x128xf32>
    %8 = arith.mulf %5, %7 : vector<16x128xf32>
    %c0_3 = arith.constant 0 : index
    %c0_4 = arith.constant 0 : index
    %9 = vector.load %arg2[%c0_3, %c0_4] : memref<16x128xf32, #tpu.memory_space<vmem>>, vector<16x128xf32>
    tpu.vector_store %arg2[%c0_3, %c0_4], %8 {strides = array<i32>} : memref<16x128xf32, #tpu.memory_space<vmem>>, vector<16x128xf32>,
    return
  }
  func.func @transform_0(%arg0: i32) -> (i32, i32) {
    %c0_i32 = arith.constant 0 : i32
    %c0_i32_0 = arith.constant 0 : i32
    return %arg0, %c0_i32 : i32, i32
  }
  func.func @transform_1(%arg0: i32) -> (i32, i32) {
    %c0_i32 = arith.constant 0 : i32
    %c0_i32_0 = arith.constant 0 : i32
    return %arg0, %c0_i32 : i32, i32
  }
}

</mosaic_0001>

<llo_original>
// kernel: tpu_custom_call.1
$region0: #{tpu_custom_call.1}
  #allocation0 [shape = 'u32[]', space=smem, size = 0x4, offset = 0x4, fixed_abs, tag = 'smem constant byte address 0x4 - core index']
  #allocation1 [shape = 'u32[144,128]{1,0:T(1,128)}', space=vmem, size = 0x12000, scoped, tag = 'internal scratch']
  %s0 = inlined_call_operand.hbm [shape: f32[16,128], index: 0, kind: input, shape index: {}]
  %s1 = inlined_call_operand.hbm [shape: f32[16,128], index: 1, kind: output, shape index: {}]
  %s2 = sld [smem:[#allocation0]]
  $region18: #{tpu_custom_call.1} parent=0
    _
  %s4 = ssub.s32 1, %s2
  %s5 = scalar_select 0, %s4, %s2
  $region1: #{tpu_custom_call.1} parent=0
    #allocation2 [shape = 'u8[8192]{0}', space=vmem, size = 0x2000, scoped, tag = 'input window, operand 0, single buffered']
    #allocation3 [shape = 's32[1]{0}', space=sflag, size = 0x4, scoped, tag = 'scoped memory for tpu_custom_call.1']
    #allocation4 [shape = 's32[1]{0}', space=sflag, size = 0x4, scoped, tag = 'scoped memory for tpu_custom_call.1']
    #allocation5 [shape = 'u8[8192]{0}', space=vmem, size = 0x2000, scoped, tag = 'output window, operand 0, single buffered']
    %6 = vsyncpa [#allocation3], 0
    %7 = vsyncpa [#allocation4], 0
    // Predicated region
    $region2: #{tpu_custom_call.1} parent=1 // pred_check
      _
    $region3: #{tpu_custom_call.1} parent=1 // pred_check_branch
      %9 = sbr.rel (0) target = $region5
    $region4: #{tpu_custom_call.1} parent=1 // pred_region
      %s11 = ssub.s32 256, 256
      %12 = vsyncadd [#allocation3], %s11
      %s13 = sshll.u32 [#allocation2], 4
      %s14 = int_to_ptr.vmem [resolvable:$true] %s13
      %19 = dma.hbm_to_vmem [thread:$0]  %s0, 256, %s14, [#allocation3], 128, 128, 8
    $region5: #{tpu_custom_call.1} parent=1 // pred_fallthru
      _
    // Predicated region
    $region6: #{tpu_custom_call.1} parent=1 // pred_check
      _
    $region7: #{tpu_custom_call.1} parent=1 // pred_check_branch
      %21 = sbr.rel (0) target = $region9
    $region8: #{tpu_custom_call.1} parent=1 // pred_region
      %22 = dma.done [#allocation3], 256
    $region9: #{tpu_custom_call.1} parent=1 // pred_fallthru
      _
    %v23 = vld [vmem:[#allocation2] sm:$0xff]
    %v24 = vld [vmem:[#allocation2 + $0x8] sm:$0xff]
    %v25 = vmul.f32 %v23, 0.70710677
    %v26 = vmul.f32 %v24, 0.70710677
    %v27 = verf.f32.pop %v25
    %v28 = verf.f32.pop %v26
    %v29 = vmul.f32 %v23, 0.5
    %v30 = vmul.f32 %v24, 0.5
    %v31 = vadd.f32 %v27, 1.0
    %v32 = vadd.f32 %v28, 1.0
    %v33 = vmul.f32 %v29, %v31
    %v34 = vmul.f32 %v30, %v32
    %35 = vst [vmem:[#allocation5] sm:$0xff] %v33
    %36 = vst [vmem:[#allocation5 + $0x8] sm:$0xff] %v34
    // Predicated region
    $region10: #{tpu_custom_call.1} parent=1 // pred_check
      _
    $region11: #{tpu_custom_call.1} parent=1 // pred_check_branch
      %38 = sbr.rel (0) target = $region13
    $region12: #{tpu_custom_call.1} parent=1 // pred_region
      %s40 = ssub.s32 256, 256
      %41 = vsyncadd [#allocation4], %s40
      %s42 = sshll.u32 [#allocation5], 4
      %s43 = int_to_ptr.vmem [resolvable:$true] %s42
      %48 = dma.vmem_to_hbm [thread:$0]  %s43, 256, %s1, [#allocation4], 128, 128, 8
    $region13: #{tpu_custom_call.1} parent=1 // pred_fallthru
      _
    // Predicated region
    $region14: #{tpu_custom_call.1} parent=1 // pred_check
      _
    $region15: #{tpu_custom_call.1} parent=1 // pred_check_branch
      %50 = sbr.rel (0) target = $region17
    $region16: #{tpu_custom_call.1} parent=1 // pred_region
      %51 = dma.done [#allocation4], 256
    $region17: #{tpu_custom_call.1} parent=1 // pred_fallthru
      _
    %52 = vsyncpa [#allocation3], 1
    %53 = vsyncpa [#allocation4], 1

</llo_original>
